<compile_context>
chip_gen: v5e
topology: v5e:2x2
jax: 0.10.0
libtpu: 0.0.40
codegen_flags: <defaults>
</compile_context>

<pallas_src>
import functools

import jax
import jax.numpy as jnp
from jax.experimental import pallas as pl
from jax.experimental.pallas import tpu as pltpu


def _round_up(x, m):
    return ((x + m - 1) // m) * m


# ----------------------------------------------------------------------------- kernel
def generator_kernel(x_ref, w1_ref, b1_ref, w2_ref, b2_ref, w3_ref, b3_ref, o_ref):
    cdt = w1_ref.dtype  # compute dtype for MXU operands (bf16 or f32)
    # Cast the x tile in-kernel (VPU, hidden under the matmuls) instead of a
    # separate XLA cast pass in the wrapper.
    x = x_ref[...].astype(cdt)
    # layer 1: Linear + ReLU (MXU matmul, f32 accumulate; bias/ReLU on VPU in f32)
    h = jnp.dot(x, w1_ref[...], preferred_element_type=jnp.float32)
    h = jnp.maximum(h + b1_ref[...], 0.0).astype(cdt)
    # layer 2: Linear + ReLU
    h = jnp.dot(h, w2_ref[...], preferred_element_type=jnp.float32)
    h = jnp.maximum(h + b2_ref[...], 0.0).astype(cdt)
    # layer 3: Linear + Tanh (tanh goes to the EUP)
    h = jnp.dot(h, w3_ref[...], preferred_element_type=jnp.float32)
    o_ref[...] = jnp.tanh(h + b3_ref[...]).astype(o_ref.dtype)


def _const_block_spec(shape):
    """Weights/biases: same block every grid step -> single pipeline buffer."""
    idx = lambda i: (0, 0)
    try:
        return pl.BlockSpec(shape, idx, pipeline_mode=pl.Buffered(1))
    except Exception:  # older jax without pipeline_mode= / Buffered
        return pl.BlockSpec(shape, idx)


# ----------------------------------------------------------------------------- wrapper
@functools.partial(
    jax.jit,
    static_argnames=("block_b", "out_dtype", "num_tensorcores", "out_features"),
)
def generator_forward(x, w1, b1, w2, b2, w3, b3, *, block_b=512, out_dtype=None,
                      num_tensorcores=1, out_features=None):
    """Fused Generator forward.  Params must come from `prepare_params` (weights
    already in the compute dtype, biases f32, feature dims lane-padded)."""
    B = x.shape[0]
    in_dim, hid1 = w1.shape
    hid2 = w2.shape[1]
    out_dim = w3.shape[1]
    assert x.shape[1] <= in_dim, "x feature dim exceeds (padded) w1 rows"

    cdt = jnp.dtype(w1.dtype)
    odt = jnp.dtype(out_dtype) if out_dtype is not None else cdt

    # Sublane multiple for the compute dtype (bf16 packs 16 rows per vreg).
    sub = 16 if cdt.itemsize == 2 else 8

    # Pick the batch tile: as large as block_b allows (amortizes the ~0.35us
    # per-step overhead), but with at least `num_tensorcores` steps on
    # multi-TC parts (v7x) so every core gets work.  Tile count is chosen to
    # minimize batch padding when B > block_b.
    min_steps = num_tensorcores if B >= num_tensorcores * sub else 1
    n_steps = max(min_steps, pl.cdiv(B, block_b))
    bb = _round_up(max(pl.cdiv(B, n_steps), sub), sub)
    B_pad = _round_up(B, bb)

    # Single fused pad (batch rows + input-feature columns) only when needed.
    pad_rows = B_pad - B
    pad_cols = in_dim - x.shape[1]
    if pad_rows or pad_cols:
        x = jnp.pad(x, ((0, pad_rows), (0, pad_cols)))

    grid = (B_pad // bb,)

    out = pl.pallas_call(
        generator_kernel,
        out_shape=jax.ShapeDtypeStruct((B_pad, out_dim), odt),
        grid_spec=pltpu.PrefetchScalarGridSpec(
            num_scalar_prefetch=0,
            grid=grid,
            in_specs=[
                pl.BlockSpec((bb, in_dim), lambda i: (i, 0)),  # x tile
                _const_block_spec((in_dim, hid1)),   # w1 (resident)
                _const_block_spec((1, hid1)),        # b1
                _const_block_spec((hid1, hid2)),     # w2
                _const_block_spec((1, hid2)),        # b2
                _const_block_spec((hid2, out_dim)),  # w3
                _const_block_spec((1, out_dim)),     # b3
            ],
            out_specs=pl.BlockSpec((bb, out_dim), lambda i: (i, 0)),
        ),
        compiler_params=pltpu.CompilerParams(
            dimension_semantics=("parallel",),
        ),
    )(x, w1, b1, w2, b2, w3, b3)

    n_out = out_features if out_features is not None else out_dim
    if B_pad != B or n_out != out_dim:
        out = out[:B, :n_out]  # single fused slice (rows + padded columns)
    return out


# ----------------------------------------------------------------------------- params
def prepare_params(w1, b1, w2, b2, w3, b3, *, compute_dtype=jnp.bfloat16,
                   lane_multiple=128, pad_features=True):
    """One-time parameter prep (do NOT call per forward): zero-pad the input /
    hidden / output feature dims to lane multiples (exact — padded hidden units
    are ReLU(0)=0 and contribute nothing) and cast weights to the compute dtype
    (biases stay f32 for f32 elementwise math in-kernel).

    Returns (params_tuple, true_out_features)."""
    in_dim, h1 = w1.shape
    h2 = w2.shape[1]
    out = w3.shape[1]
    if pad_features:
        in_p = _round_up(in_dim, lane_multiple)
        h1_p = _round_up(h1, lane_multiple)
        h2_p = _round_up(h2, lane_multiple)
        out_p = _round_up(out, lane_multiple)
        w1 = jnp.pad(w1, ((0, in_p - in_dim), (0, h1_p - h1)))
        b1 = jnp.pad(b1, ((0, 0), (0, h1_p - h1)))
        w2 = jnp.pad(w2, ((0, h1_p - h1), (0, h2_p - h2)))
        b2 = jnp.pad(b2, ((0, 0), (0, h2_p - h2)))
        w3 = jnp.pad(w3, ((0, h2_p - h2), (0, out_p - out)))
        b3 = jnp.pad(b3, ((0, 0), (0, out_p - out)))
    cdt = jnp.dtype(compute_dtype)
    params = (w1.astype(cdt), b1.astype(jnp.float32),
              w2.astype(cdt), b2.astype(jnp.float32),
              w3.astype(cdt), b3.astype(jnp.float32))
    return params, out


def init_params(key, input_size, hidden_size, output_size, dtype=jnp.float32):
    """Deterministic synthetic init (PyTorch-Linear-like uniform fan-in scaling)."""
    ks = jax.random.split(key, 6)

    def uniform(k, shape, fan_in):
        bound = 1.0 / jnp.sqrt(fan_in)
        return jax.random.uniform(k, shape, dtype, minval=-bound, maxval=bound)

    w1 = uniform(ks[0], (input_size, hidden_size), input_size)
    b1 = uniform(ks[1], (1, hidden_size), input_size)
    w2 = uniform(ks[2], (hidden_size, hidden_size), hidden_size)
    b2 = uniform(ks[3], (1, hidden_size), hidden_size)
    w3 = uniform(ks[4], (hidden_size, output_size), hidden_size)
    b3 = uniform(ks[5], (1, output_size), hidden_size)
    return w1, b1, w2, b2, w3, b3


def generator_ref(x, w1, b1, w2, b2, w3, b3, compute_dtype=jnp.float32):
    """Pure-JAX reference.  With compute_dtype=bf16 it mirrors the kernel's
    quantization of the matmul operands (f32 accumulation, f32 elementwise)."""
    cdt = jnp.dtype(compute_dtype)
    h = jnp.dot(x.astype(cdt), w1.astype(cdt), preferred_element_type=jnp.float32)
    h = jax.nn.relu(h + b1.astype(jnp.float32)).astype(cdt)
    h = jnp.dot(h, w2.astype(cdt), preferred_element_type=jnp.float32)
    h = jax.nn.relu(h + b2.astype(jnp.float32)).astype(cdt)
    h = jnp.dot(h, w3.astype(cdt), preferred_element_type=jnp.float32)
    return jnp.tanh(h + b3.astype(jnp.float32)).astype(x.dtype)


if __name__ == "__main__":
    key = jax.random.PRNGKey(0)

    # ---- Test 1: small lane-aligned shapes, exact f32 path, 2 "parallel"
    #      grid steps (v7x-style num_tensorcores=2) -------------------------
    batch, input_size, hidden_size, output_size = 128, 32, 128, 256
    k_x, k_p, key = jax.random.split(key, 3)
    x = jax.random.normal(k_x, (batch, input_size), jnp.float32)
    raw = init_params(k_p, input_size, hidden_size, output_size)
    params, n_out = prepare_params(*raw, compute_dtype=jnp.float32,
                                   pad_features=False)

    out = generator_forward(x, *params, block_b=128, out_dtype=jnp.float32,
                            num_tensorcores=2, out_features=n_out)
    out = jax.block_until_ready(out)
    ref = generator_ref(x, *raw, compute_dtype=jnp.float32)
    assert out.shape == (batch, output_size)
    assert out.dtype == jnp.float32
    assert jnp.allclose(out, ref, atol=1e-5, rtol=1e-5)

    # ---- Test 2: real model sizes (latent=100, hidden=400, output=784)
    #      padded to lane-dense 128/512/896, bf16 weights + bf16 output,
    #      single-TC single grid step, batch not a multiple of the tile -----
    batch2, latent, hidden2, output2 = 500, 100, 400, 784
    k_x2, k_p2 = jax.random.split(key)
    x2 = jax.random.normal(k_x2, (batch2, latent), jnp.float32)
    raw2 = init_params(k_p2, latent, hidden2, output2)
    params2, n_out2 = prepare_params(*raw2, compute_dtype=jnp.bfloat16)

    out2 = generator_forward(x2, *params2, block_b=512, num_tensorcores=1,
                             out_features=n_out2)
    out2 = jax.block_until_ready(out2)
    assert out2.shape == (batch2, output2)
    assert out2.dtype == jnp.bfloat16

    o2 = out2.astype(jnp.float32)
    ref2_bf16 = generator_ref(x2, *raw2, compute_dtype=jnp.bfloat16)
    ref2_f32 = generator_ref(x2, *raw2, compute_dtype=jnp.float32)
    # Tight check vs a reference modeling the same bf16 operand quantization
    # (plus bf16 output rounding), loose sanity check vs the exact f32 module.
    assert jnp.allclose(o2, ref2_bf16, atol=2e-2, rtol=2e-2)
    assert float(jnp.max(jnp.abs(o2 - ref2_f32))) < 1.5e-1

    print("KERNEL_OK")
</pallas_src>

<mosaic_0001>
module attributes {stable_mosaic.version = 11 : i64} {
  func.func @generator_kernel(%arg0: i32, %arg1: memref<64x32xf32, #tpu.memory_space<vmem>>, %arg2: memref<32x128xf32, #tpu.memory_space<vmem>>, %arg3: memref<1x128xf32, #tpu.memory_space<vmem>>, %arg4: memref<128x128xf32, #tpu.memory_space<vmem>>, %arg5: memref<1x128xf32, #tpu.memory_space<vmem>>, %arg6: memref<128x256xf32, #tpu.memory_space<vmem>>, %arg7: memref<1x256xf32, #tpu.memory_space<vmem>>, %arg8: memref<64x256xf32, #tpu.memory_space<vmem>>) attributes {dimension_semantics = [#tpu.dimension_semantics<parallel>], iteration_bounds = array<i64: 2>, scalar_prefetch = 0 : i64, scratch_operands = 0 : i64, tpu.core_type = #tpu.core_type<tc>, window_params = [{transform_indices = @transform_0, window_bounds = array<i64: 64, 32>}, {pipeline_mode = #tpu.pipeline_mode<synchronous>, transform_indices = @transform_1, window_bounds = array<i64: 32, 128>}, {pipeline_mode = #tpu.pipeline_mode<synchronous>, transform_indices = @transform_2, window_bounds = array<i64: 1, 128>}, {pipeline_mode = #tpu.pipeline_mode<synchronous>, transform_indices = @transform_3, window_bounds = array<i64: 128, 128>}, {pipeline_mode = #tpu.pipeline_mode<synchronous>, transform_indices = @transform_4, window_bounds = array<i64: 1, 128>}, {pipeline_mode = #tpu.pipeline_mode<synchronous>, transform_indices = @transform_5, window_bounds = array<i64: 128, 256>}, {pipeline_mode = #tpu.pipeline_mode<synchronous>, transform_indices = @transform_6, window_bounds = array<i64: 1, 256>}, {transform_indices = @transform_7, window_bounds = array<i64: 64, 256>}]} {
    %c0 = arith.constant 0 : index
    %c0_0 = arith.constant 0 : index
    %0 = vector.load %arg1[%c0, %c0_0] : memref<64x32xf32, #tpu.memory_space<vmem>>, vector<64x32xf32>
    %c0_1 = arith.constant 0 : index
    %c0_2 = arith.constant 0 : index
    %1 = vector.load %arg2[%c0_1, %c0_2] : memref<32x128xf32, #tpu.memory_space<vmem>>, vector<32x128xf32>
    %cst = arith.constant dense<0.000000e+00> : vector<64x128xf32>
    %2 = tpu.matmul %0, %1, %cst {dimension_numbers = #tpu.dot_dimension_numbers<[1], [0], [0], [1], [0, 0, 1, 1], [], []>} : vector<64x32xf32>, vector<32x128xf32>, vector<64x128xf32> -> vector<64x128xf32>
    %c0_3 = arith.constant 0 : index
    %c0_4 = arith.constant 0 : index
    %3 = vector.load %arg3[%c0_3, %c0_4] : memref<1x128xf32, #tpu.memory_space<vmem>>, vector<1x128xf32>
    %4 = vector.broadcast %3 : vector<1x128xf32> to vector<64x128xf32>
    %5 = arith.addf %2, %4 : vector<64x128xf32>
    %cst_5 = arith.constant 0.000000e+00 : f32
    %6 = vector.broadcast %cst_5 : f32 to vector<64x128xf32>
    %7 = arith.maximumf %5, %6 : vector<64x128xf32>
    %c0_6 = arith.constant 0 : index
    %c0_7 = arith.constant 0 : index
    %8 = vector.load %arg4[%c0_6, %c0_7] : memref<128x128xf32, #tpu.memory_space<vmem>>, vector<128x128xf32>
    %cst_8 = arith.constant dense<0.000000e+00> : vector<64x128xf32>
    %9 = tpu.matmul %7, %8, %cst_8 {dimension_numbers = #tpu.dot_dimension_numbers<[1], [0], [0], [1], [0, 0, 1, 1], [], []>} : vector<64x128xf32>, vector<128x128xf32>, vector<64x128xf32> -> vector<64x128xf32>
    %c0_9 = arith.constant 0 : index
    %c0_10 = arith.constant 0 : index
    %10 = vector.load %arg5[%c0_9, %c0_10] : memref<1x128xf32, #tpu.memory_space<vmem>>, vector<1x128xf32>
    %11 = vector.broadcast %10 : vector<1x128xf32> to vector<64x128xf32>
    %12 = arith.addf %9, %11 : vector<64x128xf32>
    %cst_11 = arith.constant 0.000000e+00 : f32
    %13 = vector.broadcast %cst_11 : f32 to vector<64x128xf32>
    %14 = arith.maximumf %12, %13 : vector<64x128xf32>
    %c0_12 = arith.constant 0 : index
    %c0_13 = arith.constant 0 : index
    %15 = vector.load %arg6[%c0_12, %c0_13] : memref<128x256xf32, #tpu.memory_space<vmem>>, vector<128x256xf32>
    %cst_14 = arith.constant dense<0.000000e+00> : vector<64x256xf32>
    %16 = tpu.matmul %14, %15, %cst_14 {dimension_numbers = #tpu.dot_dimension_numbers<[1], [0], [0], [1], [0, 0, 1, 1], [], []>} : vector<64x128xf32>, vector<128x256xf32>, vector<64x256xf32> -> vector<64x256xf32>
    %c0_15 = arith.constant 0 : index
    %c0_16 = arith.constant 0 : index
    %17 = vector.load %arg7[%c0_15, %c0_16] : memref<1x256xf32, #tpu.memory_space<vmem>>, vector<1x256xf32>
    %18 = vector.broadcast %17 : vector<1x256xf32> to vector<64x256xf32>
    %19 = arith.addf %16, %18 : vector<64x256xf32>
    %20 = math.tanh %19 : vector<64x256xf32>
    %c0_17 = arith.constant 0 : index
    %c0_18 = arith.constant 0 : index
    %21 = vector.load %arg8[%c0_17, %c0_18] : memref<64x256xf32, #tpu.memory_space<vmem>>, vector<64x256xf32>
    tpu.vector_store %arg8[%c0_17, %c0_18], %20 {strides = array<i32>} : memref<64x256xf32, #tpu.memory_space<vmem>>, vector<64x256xf32>,
    return
  }
  func.func @transform_0(%arg0: i32) -> (i32, i32) {
    %c0_i32 = arith.constant 0 : i32
    %c0_i32_0 = arith.constant 0 : i32
    return %arg0, %c0_i32 : i32, i32
  }
  func.func @transform_1(%arg0: i32) -> (i32, i32) {
    %c0_i32 = arith.constant 0 : i32
    %c0_i32_0 = arith.constant 0 : i32
    %c0_i32_1 = arith.constant 0 : i32
    return %c0_i32, %c0_i32_0 : i32, i32
  }
  func.func @transform_2(%arg0: i32) -> (i32, i32) {
    %c0_i32 = arith.constant 0 : i32
    %c0_i32_0 = arith.constant 0 : i32
    %c0_i32_1 = arith.constant 0 : i32
    return %c0_i32, %c0_i32_0 : i32, i32
  }
  func.func @transform_3(%arg0: i32) -> (i32, i32) {
    %c0_i32 = arith.constant 0 : i32
    %c0_i32_0 = arith.constant 0 : i32
    %c0_i32_1 = arith.constant 0 : i32
    return %c0_i32, %c0_i32_0 : i32, i32
  }
  func.func @transform_4(%arg0: i32) -> (i32, i32) {
    %c0_i32 = arith.constant 0 : i32
    %c0_i32_0 = arith.constant 0 : i32
    %c0_i32_1 = arith.constant 0 : i32
    return %c0_i32, %c0_i32_0 : i32, i32
  }
  func.func @transform_5(%arg0: i32) -> (i32, i32) {
    %c0_i32 = arith.constant 0 : i32
    %c0_i32_0 = arith.constant 0 : i32
    %c0_i32_1 = arith.constant 0 : i32
    return %c0_i32, %c0_i32_0 : i32, i32
  }
  func.func @transform_6(%arg0: i32) -> (i32, i32) {
    %c0_i32 = arith.constant 0 : i32
    %c0_i32_0 = arith.constant 0 : i32
    %c0_i32_1 = arith.constant 0 : i32
    return %c0_i32, %c0_i32_0 : i32, i32
  }
  func.func @transform_7(%arg0: i32) -> (i32, i32) {
    %c0_i32 = arith.constant 0 : i32
    %c0_i32_0 = arith.constant 0 : i32
    return %arg0, %c0_i32 : i32, i32
  }
}

</mosaic_0001>

<llo_original>
// kernel: generator_forward.1
$region0: #{generator_forward.1}
  #allocation0 [shape = 'u32[]', space=smem, size = 0x4, offset = 0x4, fixed_abs, tag = 'smem constant byte address 0x4 - core index']
  #allocation1 [shape = 'u32[72,128]{1,0:T(1,128)}', space=vmem, size = 0x9000, scoped, tag = 'internal scratch']
  %s0 = inlined_call_operand.vmem [shape: f32[128,32], index: 0, kind: input, shape index: {}]
  %s1 = inlined_call_operand.vmem [shape: f32[32,128], index: 1, kind: input, shape index: {}]
  %s2 = inlined_call_operand.hbm [shape: f32[1,128], index: 2, kind: input, shape index: {}]
  %s3 = inlined_call_operand.vmem [shape: f32[128,128], index: 3, kind: input, shape index: {}]
  %s4 = inlined_call_operand.vmem [shape: f32[1,128], index: 4, kind: input, shape index: {}]
  %s5 = inlined_call_operand.hbm [shape: f32[128,256], index: 5, kind: input, shape index: {}]
  %s6 = inlined_call_operand.vmem [shape: f32[1,256], index: 6, kind: input, shape index: {}]
  %s7 = inlined_call_operand.hbm [shape: f32[128,256], index: 7, kind: output, shape index: {}]
  %s8 = sld [smem:[#allocation0]]
  $region69: #{generator_forward.1} parent=0
    _
  %s10 = ssub.s32 1, %s8
  %s11 = scalar_select 0, %s10, %s8
  $region1: #{generator_forward.1} parent=0
    #allocation2 [shape = 'u8[512]{0}', space=vmem, size = 0x400, scoped, tag = 'input window, operand 2, single buffered']
    #allocation3 [shape = 's32[2]{0}', space=sflag, size = 0x8, scoped, tag = 'scoped memory for generator_forward.1']
    #allocation4 [shape = 's32[2]{0}', space=sflag, size = 0x8, scoped, tag = 'scoped memory for generator_forward.1']
    #allocation5 [shape = 'u8[131072]{0}', space=vmem, size = 0x20000, scoped, tag = 'input window, operand 5, single buffered']
    #allocation6 [shape = 's32[1]{0}', space=sflag, size = 0x4, scoped, tag = 'scoped memory for generator_forward.1']
    #allocation7 [shape = 'u8[131072]{0}', space=vmem, size = 0x20000, scoped, tag = 'output window, operand 0']
    %12 = vsyncpa [#allocation3], 0
    %13 = vsyncpa [#allocation6], 0
    %14 = vsyncpa [#allocation4], 0
    %s15 = scalar_lea.sflag [#allocation4], 1
    %16 = vsyncpa %s15, 0
    loop: start=0, step=1, limit=4
    $region2: #{generator_forward.1} parent=1 // loop_pre_header
      _
    $region3: #{generator_forward.1} parent=1 // loop_header
      %s18 = sphi 0, %s22
      %p19 = scmp.ge.s32.totalorder %s18, 4
      %s28 = sphi 0, %s30
      %s31 = sphi 0, %s28
      %s32 = sphi 0, %s31
      %s48 = sphi 0, %s32
      %s52 = sphi 0, %s52
      %s54 = sphi 0, %s52
      %s55 = sphi 0, %s54
      %s69 = sphi 0, %s55
      %s73 = sphi 0, %s73
      %s75 = sphi 0, %s73
      %s76 = sphi 0, %s75
      %s90 = sphi 0, %s76
      %s94 = sphi 0, %s94
      %s96 = sphi 0, %s94
      %s97 = sphi 0, %s96
      %s111 = sphi 0, %s97
      %s115 = sphi 0, %s115
      %s117 = sphi 0, %s115
      %s118 = sphi 0, %s117
      %s132 = sphi 0, %s118
      %s136 = sphi 0, %s136
      %s138 = sphi 0, %s136
      %s139 = sphi 0, %s138
      %s153 = sphi 0, %s139
      %s157 = sphi 0, %s157
      %s159 = sphi 0, %s157
      %s160 = sphi 0, %s159
      %s174 = sphi 0, %s160
      %s180 = sphi 0, %s182
      %s183 = sphi 0, %s180
      %s184 = sphi 0, %s183
      %s200 = sphi 0, %s184
    $region4: #{generator_forward.1} parent=1 // loop_header_branch
      %21 = sbr.rel (%p19) target = $region8
    $region5: #{generator_forward.1} parent=1 // loop_body
      %s23 = ssub.s32 %s18, 1
      %s24 = ssub.s32 %s18, 2
      %s25 = sadd.s32 %s18, 1
      %s26 = ssub.s32 %s18, %s25
      %p27 = scmp.eq.s32.totalorder %s26, 0
      %s29 = sadd.s32 %s28, 1
      %s30 = scalar_select %p27, %s28, %s29
      %p33 = pneg %p27
      %p34 = scmp.eq.s32.totalorder %s18, 1
      %p35 = por %p33, %p34
      %p36 = scmp.ne.s32.totalorder %s28, %s31
      %p37 = scmp.eq.s32.totalorder %s18, 0
      %p38 = por %p36, %p37
      %p39 = scmp.ne.s32.totalorder %s28, %s31
      %p40 = scmp.eq.s32.totalorder %s23, 1
      %p41 = por %p39, %p40
      %p42 = scmp.ne.s32.totalorder %s31, %s32
      %p43 = scmp.eq.s32.totalorder %s23, 0
      %p44 = por %p42, %p43
      %p45 = scmp.ne.s32.totalorder %s31, %s32
      %p46 = scmp.eq.s32.totalorder %s24, 1
      %p47 = por %p45, %p46
      %p49 = scmp.ne.s32.totalorder %s32, %s48
      %p50 = scmp.eq.s32.totalorder %s24, 0
      %p51 = por %p49, %p50
      %s53 = sadd.s32 %s52, 1
      %p56 = scmp.eq.s32.totalorder %s18, 1
      %p57 = scmp.ne.s32.totalorder %s52, %s54
      %p58 = scmp.eq.s32.totalorder %s18, 0
      %p59 = por %p57, %p58
      %p60 = scmp.ne.s32.totalorder %s52, %s54
      %p61 = scmp.eq.s32.totalorder %s23, 1
      %p62 = por %p60, %p61
      %p63 = scmp.ne.s32.totalorder %s54, %s55
      %p64 = scmp.eq.s32.totalorder %s23, 0
      %p65 = por %p63, %p64
      %p66 = scmp.ne.s32.totalorder %s54, %s55
      %p67 = scmp.eq.s32.totalorder %s24, 1
      %p68 = por %p66, %p67
      %p70 = scmp.ne.s32.totalorder %s55, %s69
      %p71 = scmp.eq.s32.totalorder %s24, 0
      %p72 = por %p70, %p71
      %s74 = sadd.s32 %s73, 1
      %p77 = scmp.eq.s32.totalorder %s18, 1
      %p78 = scmp.ne.s32.totalorder %s73, %s75
      %p79 = scmp.eq.s32.totalorder %s18, 0
      %p80 = por %p78, %p79
      %p81 = scmp.ne.s32.totalorder %s73, %s75
      %p82 = scmp.eq.s32.totalorder %s23, 1
      %p83 = por %p81, %p82
      %p84 = scmp.ne.s32.totalorder %s75, %s76
      %p85 = scmp.eq.s32.totalorder %s23, 0
      %p86 = por %p84, %p85
      %p87 = scmp.ne.s32.totalorder %s75, %s76
      %p88 = scmp.eq.s32.totalorder %s24, 1
      %p89 = por %p87, %p88
      %p91 = scmp.ne.s32.totalorder %s76, %s90
      %p92 = scmp.eq.s32.totalorder %s24, 0
      %p93 = por %p91, %p92
      %s95 = sadd.s32 %s94, 1
      %p98 = scmp.eq.s32.totalorder %s18, 1
      %p99 = scmp.ne.s32.totalorder %s94, %s96
      %p100 = scmp.eq.s32.totalorder %s18, 0
      %p101 = por %p99, %p100
      %p102 = scmp.ne.s32.totalorder %s94, %s96
      %p103 = scmp.eq.s32.totalorder %s23, 1
      %p104 = por %p102, %p103
      %p105 = scmp.ne.s32.totalorder %s96, %s97
      %p106 = scmp.eq.s32.totalorder %s23, 0
      %p107 = por %p105, %p106
      %p108 = scmp.ne.s32.totalorder %s96, %s97
      %p109 = scmp.eq.s32.totalorder %s24, 1
      %p110 = por %p108, %p109
      %p112 = scmp.ne.s32.totalorder %s97, %s111
      %p113 = scmp.eq.s32.totalorder %s24, 0
      %p114 = por %p112, %p113
      %s116 = sadd.s32 %s115, 1
      %p119 = scmp.eq.s32.totalorder %s18, 1
      %p120 = scmp.ne.s32.totalorder %s115, %s117
      %p121 = scmp.eq.s32.totalorder %s18, 0
      %p122 = por %p120, %p121
      %p123 = scmp.ne.s32.totalorder %s115, %s117
      %p124 = scmp.eq.s32.totalorder %s23, 1
      %p125 = por %p123, %p124
      %p126 = scmp.ne.s32.totalorder %s117, %s118
      %p127 = scmp.eq.s32.totalorder %s23, 0
      %p128 = por %p126, %p127
      %p129 = scmp.ne.s32.totalorder %s117, %s118
      %p130 = scmp.eq.s32.totalorder %s24, 1
      %p131 = por %p129, %p130
      %p133 = scmp.ne.s32.totalorder %s118, %s132
      %p134 = scmp.eq.s32.totalorder %s24, 0
      %p135 = por %p133, %p134
      %s137 = sadd.s32 %s136, 1
      %p140 = scmp.eq.s32.totalorder %s18, 1
      %p141 = scmp.ne.s32.totalorder %s136, %s138
      %p142 = scmp.eq.s32.totalorder %s18, 0
      %p143 = por %p141, %p142
      %p144 = scmp.ne.s32.totalorder %s136, %s138
      %p145 = scmp.eq.s32.totalorder %s23, 1
      %p146 = por %p144, %p145
      %p147 = scmp.ne.s32.totalorder %s138, %s139
      %p148 = scmp.eq.s32.totalorder %s23, 0
      %p149 = por %p147, %p148
      %p150 = scmp.ne.s32.totalorder %s138, %s139
      %p151 = scmp.eq.s32.totalorder %s24, 1
      %p152 = por %p150, %p151
      %p154 = scmp.ne.s32.totalorder %s139, %s153
      %p155 = scmp.eq.s32.totalorder %s24, 0
      %p156 = por %p154, %p155
      %s158 = sadd.s32 %s157, 1
      %p161 = scmp.eq.s32.totalorder %s18, 1
      %p162 = scmp.ne.s32.totalorder %s157, %s159
      %p163 = scmp.eq.s32.totalorder %s18, 0
      %p164 = por %p162, %p163
      %p165 = scmp.ne.s32.totalorder %s157, %s159
      %p166 = scmp.eq.s32.totalorder %s23, 1
      %p167 = por %p165, %p166
      %p168 = scmp.ne.s32.totalorder %s159, %s160
      %p169 = scmp.eq.s32.totalorder %s23, 0
      %p170 = por %p168, %p169
      %p171 = scmp.ne.s32.totalorder %s159, %s160
      %p172 = scmp.eq.s32.totalorder %s24, 1
      %p173 = por %p171, %p172
      %p175 = scmp.ne.s32.totalorder %s160, %s174
      %p176 = scmp.eq.s32.totalorder %s24, 0
      %p177 = por %p175, %p176
      %s178 = ssub.s32 %s18, %s25
      %p179 = scmp.eq.s32.totalorder %s178, 0
      %s181 = sadd.s32 %s180, 1
      %s182 = scalar_select %p179, %s180, %s181
      %p185 = pneg %p179
      %p186 = scmp.eq.s32.totalorder %s18, 1
      %p187 = por %p185, %p186
      %p188 = scmp.ne.s32.totalorder %s180, %s183
      %p189 = scmp.eq.s32.totalorder %s18, 0
      %p190 = por %p188, %p189
      %p191 = scmp.ne.s32.totalorder %s180, %s183
      %p192 = scmp.eq.s32.totalorder %s23, 1
      %p193 = por %p191, %p192
      %p194 = scmp.ne.s32.totalorder %s183, %s184
      %p195 = scmp.eq.s32.totalorder %s23, 0
      %p196 = por %p194, %p195
      %p197 = scmp.ne.s32.totalorder %s183, %s184
      %p198 = scmp.eq.s32.totalorder %s24, 1
      %p199 = por %p197, %p198
      %p201 = scmp.ne.s32.totalorder %s184, %s200
      %p202 = scmp.eq.s32.totalorder %s24, 0
      %p203 = por %p201, %p202
      %p204 = scmp.le.s32.totalorder 1, %s18
      %p205 = scmp.lt.s32.totalorder %s18, 3
      %p206 = pnand %p204, %p205
      %p207 = pneg %p206
      // Predicated region
      $region9: #{generator_forward.1} parent=5 // pred_check
        _
      $region10: #{generator_forward.1} parent=5 // pred_check_branch
        %209 = sbr.rel (%p206) target = $region12
      $region11: #{generator_forward.1} parent=5 // pred_region
        %s210 = ssub.s32 %s18, 1
        // Predicated region
        $region13: #{generator_forward.1} parent=11 // pred_check
          %p211 = pneg %p65
        $region14: #{generator_forward.1} parent=11 // pred_check_branch
          %213 = sbr.rel (%p211) target = $region16
        $region15: #{generator_forward.1} parent=11 // pred_region
          _
        $region16: #{generator_forward.1} parent=11 // pred_fallthru
          _
        // Predicated region
        $region17: #{generator_forward.1} parent=11 // pred_check
          %p214 = pneg %p86
        $region18: #{generator_forward.1} parent=11 // pred_check_branch
          %216 = sbr.rel (%p214) target = $region20
        $region19: #{generator_forward.1} parent=11 // pred_region
          %218 = vsyncadd [#allocation3], 0
          %s220 = sshll.u32 %s2, 4
          %s221 = int_to_ptr.hbm [resolvable:$true] %s220
          %s222 = sshll.u32 [#allocation2], 4
          %s223 = int_to_ptr.vmem [resolvable:$true] %s222
          %225 = dma.hbm_to_vmem [thread:$0]  %s221, 16, %s223, [#allocation3]
        $region20: #{generator_forward.1} parent=11 // pred_fallthru
          _
        // Predicated region
        $region21: #{generator_forward.1} parent=11 // pred_check
          %p226 = pneg %p107
        $region22: #{generator_forward.1} parent=11 // pred_check_branch
          %228 = sbr.rel (%p226) target = $region24
        $region23: #{generator_forward.1} parent=11 // pred_region
          _
        $region24: #{generator_forward.1} parent=11 // pred_fallthru
          _
        // Predicated region
        $region25: #{generator_forward.1} parent=11 // pred_check
          %p229 = pneg %p128
        $region26: #{generator_forward.1} parent=11 // pred_check_branch
          %231 = sbr.rel (%p229) target = $region28
        $region27: #{generator_forward.1} parent=11 // pred_region
          _
        $region28: #{generator_forward.1} parent=11 // pred_fallthru
          _
        // Predicated region
        $region29: #{generator_forward.1} parent=11 // pred_check
          %p232 = pneg %p149
        $region30: #{generator_forward.1} parent=11 // pred_check_branch
          %234 = sbr.rel (%p232) target = $region32
        $region31: #{generator_forward.1} parent=11 // pred_region
          %236 = vsyncadd [#allocation6], 0
          %s237 = sshll.u32 %s5, 4
          %s238 = int_to_ptr.hbm [resolvable:$true] %s237
          %s239 = sshll.u32 [#allocation5], 4
          %s240 = int_to_ptr.vmem [resolvable:$true] %s239
          %245 = dma.hbm_to_vmem [thread:$0]  %s238, 4096, %s240, [#allocation6], 256, 256, 16
        $region32: #{generator_forward.1} parent=11 // pred_fallthru
          _
        // Predicated region
        $region33: #{generator_forward.1} parent=11 // pred_check
          %p246 = pneg %p170
        $region34: #{generator_forward.1} parent=11 // pred_check_branch
          %248 = sbr.rel (%p246) target = $region36
        $region35: #{generator_forward.1} parent=11 // pred_region
          _
        $region36: #{generator_forward.1} parent=11 // pred_fallthru
          _
      $region12: #{generator_forward.1} parent=5 // pred_fallthru
        _
      %p249 = scmp.lt.s32.totalorder %s18, 2
      // Predicated region
      $region37: #{generator_forward.1} parent=5 // pred_check
        %p250 = pneg %p249
      $region38: #{generator_forward.1} parent=5 // pred_check_branch
        %252 = sbr.rel (%p250) target = $region40
      $region39: #{generator_forward.1} parent=5 // pred_region
        // Predicated region
        $region41: #{generator_forward.1} parent=39 // pred_check
          %p253 = pneg %p38
        $region42: #{generator_forward.1} parent=39 // pred_check_branch
          %255 = sbr.rel (%p253) target = $region44
        $region43: #{generator_forward.1} parent=39 // pred_region
          %s256 = smul.u32 8, %s18
          %p257 = scmp.lt.s32.totalorder %s256, 15
          %s258 = scalar_select %p257, %s256, 15
          %s259 = smul.addr %s258, 8
          %s260 = scalar_lea.vmem %s0, %s259
          %s261 = smul.u32 8, %s18
        $region44: #{generator_forward.1} parent=39 // pred_fallthru
          _
      $region40: #{generator_forward.1} parent=5 // pred_fallthru
        _
      %p262 = scmp.le.s32.totalorder 1, %s18
      %p263 = scmp.lt.s32.totalorder %s18, 3
      %p264 = pnand %p262, %p263
      %p265 = pneg %p264
      // Predicated region
      $region45: #{generator_forward.1} parent=5 // pred_check
        _
      $region46: #{generator_forward.1} parent=5 // pred_check_branch
        %267 = sbr.rel (%p264) target = $region48
      $region47: #{generator_forward.1} parent=5 // pred_region
        %s268 = ssub.s32 %s18, 1
        // Predicated region
        $region49: #{generator_forward.1} parent=47 // pred_check
          %p269 = pneg %p86
        $region50: #{generator_forward.1} parent=47 // pred_check_branch
          %271 = sbr.rel (%p269) target = $region52
        $region51: #{generator_forward.1} parent=47 // pred_region
          %273 = dma.done [#allocation3], 16
        $region52: #{generator_forward.1} parent=47 // pred_fallthru
          _
        // Predicated region
        $region53: #{generator_forward.1} parent=47 // pred_check
          %p274 = pneg %p149
        $region54: #{generator_forward.1} parent=47 // pred_check_branch
          %276 = sbr.rel (%p274) target = $region56
        $region55: #{generator_forward.1} parent=47 // pred_region
          %278 = dma.done [#allocation6], 4096
        $region56: #{generator_forward.1} parent=47 // pred_fallthru
          _
        %s279 = smul.u32 8, %s23
        %p280 = scmp.lt.s32.totalorder %s279, 15
        %s281 = scalar_select %p280, %s279, 15
        %s282 = smul.addr %s281, 8
        %s283 = scalar_lea.vmem %s0, %s282
        %p284 = pneg %p44
        %p285 = pneg %p41
        %p286 = pneg %p65
        %p287 = pneg %p62
        %p288 = pneg %p86
        %p289 = pneg %p83
        %p290 = pneg %p107
        %p291 = pneg %p104
        %p292 = pneg %p128
        %p293 = pneg %p125
        %p294 = pneg %p149
        %p295 = pneg %p146
        %p296 = pneg %p170
        %p297 = pneg %p167
        %p298 = pneg %p196
        %p299 = pneg %p193
        %s300 = sand.u32 %s183, 1
        %s301 = scalar_lea.sflag [#allocation4], %s300
        %s302 = sand.u32 %s183, 1
        %s303 = smul.addr %s302, 128
        %s304 = scalar_lea.vmem [#allocation7], %s303
        %s305 = smul.u32 8, %s23
        %p306 = scmp.lt.s32.totalorder %s305, 15
        %s307 = scalar_select %p306, %s305, 15
        %s308 = smul.addr %s307, 8
        %s309 = scalar_lea.vmem %s0, %s308
        %s310 = smul.u32 8, %s23
        %s311 = smul.u32 8, %s23
        %v312 = vld [vmem:[%s309] sm:$0xff]
        %v313 = vld [vmem:[%s309 + $0x8] sm:$0xff]
        %v314 = vld [vmem:[%s309 + $0x10] sm:$0xff]
        %v315 = vld [vmem:[%s309 + $0x18] sm:$0xff]
        %v316 = vld [vmem:[%s309 + $0x20] sm:$0xff]
        %v317 = vld [vmem:[%s309 + $0x28] sm:$0xff]
        %v318 = vld [vmem:[%s309 + $0x30] sm:$0xff]
        %v319 = vld [vmem:[%s309 + $0x38] sm:$0xff]
        %v320 = vld [vmem:[%s1] sm:$0xff]
        %v321 = vld [vmem:[%s1 + $0x8] sm:$0xff]
        %v322 = vld [vmem:[%s1 + $0x10] sm:$0xff]
        %v323 = vld [vmem:[%s1 + $0x18] sm:$0xff]
        %v324 = vld [vmem:[#allocation2] sm:$0x1]
        %v326 = vperm.slane %v324, 0
        %vm328 = vcmask 261120
        %v330 = vsel %vm328, %v312, 0
        %v333 = vsel %vm328, %v313, 0
        %v336 = vsel %vm328, %v314, 0
        %v339 = vsel %vm328, %v315, 0
        %v342 = vsel %vm328, %v316, 0
        %v345 = vsel %vm328, %v317, 0
        %v348 = vsel %vm328, %v318, 0
        %v351 = vsel %vm328, %v319, 0
        %353 = vmatpush.msra.mxu0 0.0
        %354 = vmatpush.msra.mxu0 0.0
        %355 = vmatpush.msra.mxu0 0.0
        %356 = vmatpush.msra.mxu0 0.0
        %357 = vmatpush.msra.mxu0 0.0
        %358 = vmatpush.msra.mxu0 0.0
        %359 = vmatpush.msra.mxu0 0.0
        %360 = vmatpush.msra.mxu0 0.0
        %361 = vmatpush.msra.mxu0 0.0
        %362 = vmatpush.msra.mxu0 0.0
        %363 = vmatpush.msra.mxu0 0.0
        %364 = vmatpush.msra.mxu0 0.0
        %365 = vmatpush.msra.mxu0 %v323
        %366 = vmatpush.msra.mxu0 %v322
        %367 = vmatpush.msra.mxu0 %v321
        %368 = vmatpush.msra.mxu0 %v320
        %369 = vmatmul.f32.gmra.mxu0 %v330
        %v370 = vpop.f32.mrf.mxu0
        %v371 = vadd.f32 %v326, %v370
        %372 = vmatmul.f32.gmra.mxu0 %v333
        %v373 = vpop.f32.mrf.mxu0
        %v374 = vadd.f32 %v326, %v373
        %375 = vmatmul.f32.gmra.mxu0 %v336
        %v376 = vpop.f32.mrf.mxu0
        %v377 = vadd.f32 %v326, %v376
        %378 = vmatmul.f32.gmra.mxu0 %v339
        %v379 = vpop.f32.mrf.mxu0
        %v380 = vadd.f32 %v326, %v379
        %381 = vmatmul.f32.gmra.mxu0 %v342
        %v382 = vpop.f32.mrf.mxu0
        %v383 = vadd.f32 %v326, %v382
        %384 = vmatmul.f32.gmra.mxu0 %v345
        %v385 = vpop.f32.mrf.mxu0
        %v386 = vadd.f32 %v326, %v385
        %387 = vmatmul.f32.gmra.mxu0 %v348
        %v388 = vpop.f32.mrf.mxu0
        %v389 = vadd.f32 %v326, %v388
        %390 = vmatmul.f32.gmra.mxu0 %v351
        %v391 = vpop.f32.mrf.mxu0
        %v392 = vadd.f32 %v326, %v391
        %393 = vdwg.mxu0
        %v394 = vmax.f32 %v371, 0.0
        %v395 = vmax.f32 %v374, 0.0
        %v396 = vmax.f32 %v377, 0.0
        %v397 = vmax.f32 %v380, 0.0
        %v398 = vmax.f32 %v383, 0.0
        %v399 = vmax.f32 %v386, 0.0
        %v400 = vmax.f32 %v389, 0.0
        %v401 = vmax.f32 %v392, 0.0
        %v402 = vld [vmem:[%s3] sm:$0xff]
        %v403 = vld [vmem:[%s3 + $0x8] sm:$0xff]
        %v404 = vld [vmem:[%s3 + $0x10] sm:$0xff]
        %v405 = vld [vmem:[%s3 + $0x18] sm:$0xff]
        %v406 = vld [vmem:[%s3 + $0x20] sm:$0xff]
        %v407 = vld [vmem:[%s3 + $0x28] sm:$0xff]
        %v408 = vld [vmem:[%s3 + $0x30] sm:$0xff]
        %v409 = vld [vmem:[%s3 + $0x38] sm:$0xff]
        %v410 = vld [vmem:[%s3 + $0x40] sm:$0xff]
        %v411 = vld [vmem:[%s3 + $0x48] sm:$0xff]
        %v412 = vld [vmem:[%s3 + $0x50] sm:$0xff]
        %v413 = vld [vmem:[%s3 + $0x58] sm:$0xff]
        %v414 = vld [vmem:[%s3 + $0x60] sm:$0xff]
        %v415 = vld [vmem:[%s3 + $0x68] sm:$0xff]
        %v416 = vld [vmem:[%s3 + $0x70] sm:$0xff]
        %v417 = vld [vmem:[%s3 + $0x78] sm:$0xff]
        %v418 = vld [vmem:[%s4] sm:$0x1]
        %v420 = vperm.slane %v418, 0
        %422 = vmatpush.msra.mxu0 %v417
        %423 = vmatpush.msra.mxu0 %v416
        %424 = vmatpush.msra.mxu0 %v415
        %425 = vmatpush.msra.mxu0 %v414
        %426 = vmatpush.msra.mxu0 %v413
        %427 = vmatpush.msra.mxu0 %v412
        %428 = vmatpush.msra.mxu0 %v411
        %429 = vmatpush.msra.mxu0 %v410
        %430 = vmatpush.msra.mxu0 %v409
        %431 = vmatpush.msra.mxu0 %v408
        %432 = vmatpush.msra.mxu0 %v407
        %433 = vmatpush.msra.mxu0 %v406
        %434 = vmatpush.msra.mxu0 %v405
        %435 = vmatpush.msra.mxu0 %v404
        %436 = vmatpush.msra.mxu0 %v403
        %437 = vmatpush.msra.mxu0 %v402
        %438 = vmatmul.f32.gmra.mxu0 %v394
        %v439 = vpop.f32.mrf.mxu0
        %v440 = vadd.f32 %v420, %v439
        %441 = vmatmul.f32.gmra.mxu0 %v395
        %v442 = vpop.f32.mrf.mxu0
        %v443 = vadd.f32 %v420, %v442
        %444 = vmatmul.f32.gmra.mxu0 %v396
        %v445 = vpop.f32.mrf.mxu0
        %v446 = vadd.f32 %v420, %v445
        %447 = vmatmul.f32.gmra.mxu0 %v397
        %v448 = vpop.f32.mrf.mxu0
        %v449 = vadd.f32 %v420, %v448
        %450 = vmatmul.f32.gmra.mxu0 %v398
        %v451 = vpop.f32.mrf.mxu0
        %v452 = vadd.f32 %v420, %v451
        %453 = vmatmul.f32.gmra.mxu0 %v399
        %v454 = vpop.f32.mrf.mxu0
        %v455 = vadd.f32 %v420, %v454
        %456 = vmatmul.f32.gmra.mxu0 %v400
        %v457 = vpop.f32.mrf.mxu0
        %v458 = vadd.f32 %v420, %v457
        %459 = vmatmul.f32.gmra.mxu0 %v401
        %v460 = vpop.f32.mrf.mxu0
        %v461 = vadd.f32 %v420, %v460
        %462 = vdwg.mxu0
        %v463 = vmax.f32 %v440, 0.0
        %v464 = vmax.f32 %v443, 0.0
        %v465 = vmax.f32 %v446, 0.0
        %v466 = vmax.f32 %v449, 0.0
        %v467 = vmax.f32 %v452, 0.0
        %v468 = vmax.f32 %v455, 0.0
        %v469 = vmax.f32 %v458, 0.0
        %v470 = vmax.f32 %v461, 0.0
        %v471 = vld [vmem:[#allocation5] sm:$0xff]
        %v472 = vld [vmem:[#allocation5 + $0x8] sm:$0xff]
        %v473 = vld [vmem:[#allocation5 + $0x10] sm:$0xff]
        %v474 = vld [vmem:[#allocation5 + $0x18] sm:$0xff]
        %v475 = vld [vmem:[#allocation5 + $0x20] sm:$0xff]
        %v476 = vld [vmem:[#allocation5 + $0x28] sm:$0xff]
        %v477 = vld [vmem:[#allocation5 + $0x30] sm:$0xff]
        %v478 = vld [vmem:[#allocation5 + $0x38] sm:$0xff]
        %v479 = vld [vmem:[#allocation5 + $0x40] sm:$0xff]
        %v480 = vld [vmem:[#allocation5 + $0x48] sm:$0xff]
        %v481 = vld [vmem:[#allocation5 + $0x50] sm:$0xff]
        %v482 = vld [vmem:[#allocation5 + $0x58] sm:$0xff]
        %v483 = vld [vmem:[#allocation5 + $0x60] sm:$0xff]
        %v484 = vld [vmem:[#allocation5 + $0x68] sm:$0xff]
        %v485 = vld [vmem:[#allocation5 + $0x70] sm:$0xff]
        %v486 = vld [vmem:[#allocation5 + $0x78] sm:$0xff]
        %v487 = vld [vmem:[#allocation5 + $0x80] sm:$0xff]
        %v488 = vld [vmem:[#allocation5 + $0x88] sm:$0xff]
        %v489 = vld [vmem:[#allocation5 + $0x90] sm:$0xff]
        %v490 = vld [vmem:[#allocation5 + $0x98] sm:$0xff]
        %v491 = vld [vmem:[#allocation5 + $0xa0] sm:$0xff]
        %v492 = vld [vmem:[#allocation5 + $0xa8] sm:$0xff]
        %v493 = vld [vmem:[#allocation5 + $0xb0] sm:$0xff]
        %v494 = vld [vmem:[#allocation5 + $0xb8] sm:$0xff]
        %v495 = vld [vmem:[#allocation5 + $0xc0] sm:$0xff]
        %v496 = vld [vmem:[#allocation5 + $0xc8] sm:$0xff]
        %v497 = vld [vmem:[#allocation5 + $0xd0] sm:$0xff]
        %v498 = vld [vmem:[#allocation5 + $0xd8] sm:$0xff]
        %v499 = vld [vmem:[#allocation5 + $0xe0] sm:$0xff]
        %v500 = vld [vmem:[#allocation5 + $0xe8] sm:$0xff]
        %v501 = vld [vmem:[#allocation5 + $0xf0] sm:$0xff]
        %v502 = vld [vmem:[#allocation5 + $0xf8] sm:$0xff]
        %v503 = vld [vmem:[%s6] sm:$0x3]
        %v505 = vperm.slane %v503, 0
        %v506 = vperm.slane %v503, 1
        %509 = vmatpush.msra.mxu0 %v501
        %510 = vmatpush.msra.mxu0 %v499
        %511 = vmatpush.msra.mxu0 %v497
        %512 = vmatpush.msra.mxu0 %v495
        %513 = vmatpush.msra.mxu0 %v493
        %514 = vmatpush.msra.mxu0 %v491
        %515 = vmatpush.msra.mxu0 %v489
        %516 = vmatpush.msra.mxu0 %v487
        %517 = vmatpush.msra.mxu0 %v485
        %518 = vmatpush.msra.mxu0 %v483
        %519 = vmatpush.msra.mxu0 %v481
        %520 = vmatpush.msra.mxu0 %v479
        %521 = vmatpush.msra.mxu0 %v477
        %522 = vmatpush.msra.mxu0 %v475
        %523 = vmatpush.msra.mxu0 %v473
        %524 = vmatpush.msra.mxu0 %v471
        %525 = vmatmul.f32.gmra.mxu0 %v463
        %v526 = vpop.f32.mrf.mxu0
        %v527 = vadd.f32 %v505, %v526
        %528 = vmatmul.f32.gmra.mxu0 %v464
        %v529 = vpop.f32.mrf.mxu0
        %v530 = vadd.f32 %v505, %v529
        %531 = vmatmul.f32.gmra.mxu0 %v465
        %v532 = vpop.f32.mrf.mxu0
        %v533 = vadd.f32 %v505, %v532
        %534 = vmatmul.f32.gmra.mxu0 %v466
        %v535 = vpop.f32.mrf.mxu0
        %v536 = vadd.f32 %v505, %v535
        %537 = vmatmul.f32.gmra.mxu0 %v467
        %v538 = vpop.f32.mrf.mxu0
        %v539 = vadd.f32 %v505, %v538
        %540 = vmatmul.f32.gmra.mxu0 %v468
        %v541 = vpop.f32.mrf.mxu0
        %v542 = vadd.f32 %v505, %v541
        %543 = vmatmul.f32.gmra.mxu0 %v469
        %v544 = vpop.f32.mrf.mxu0
        %v545 = vadd.f32 %v505, %v544
        %546 = vmatmul.f32.gmra.mxu0 %v470
        %v547 = vpop.f32.mrf.mxu0
        %v548 = vadd.f32 %v505, %v547
        %549 = vdwg.mxu0
        %550 = vmatpush.msra.mxu0 %v502
        %551 = vmatpush.msra.mxu0 %v500
        %552 = vmatpush.msra.mxu0 %v498
        %553 = vmatpush.msra.mxu0 %v496
        %554 = vmatpush.msra.mxu0 %v494
        %555 = vmatpush.msra.mxu0 %v492
        %556 = vmatpush.msra.mxu0 %v490
        %557 = vmatpush.msra.mxu0 %v488
        %558 = vmatpush.msra.mxu0 %v486
        %559 = vmatpush.msra.mxu0 %v484
        %560 = vmatpush.msra.mxu0 %v482
        %561 = vmatpush.msra.mxu0 %v480
        %562 = vmatpush.msra.mxu0 %v478
        %563 = vmatpush.msra.mxu0 %v476
        %564 = vmatpush.msra.mxu0 %v474
        %565 = vmatpush.msra.mxu0 %v472
        %566 = vmatmul.f32.gmra.mxu0 %v463
        %v567 = vpop.f32.mrf.mxu0
        %v568 = vadd.f32 %v506, %v567
        %569 = vmatmul.f32.gmra.mxu0 %v464
        %v570 = vpop.f32.mrf.mxu0
        %v571 = vadd.f32 %v506, %v570
        %572 = vmatmul.f32.gmra.mxu0 %v465
        %v573 = vpop.f32.mrf.mxu0
        %v574 = vadd.f32 %v506, %v573
        %575 = vmatmul.f32.gmra.mxu0 %v466
        %v576 = vpop.f32.mrf.mxu0
        %v577 = vadd.f32 %v506, %v576
        %578 = vmatmul.f32.gmra.mxu0 %v467
        %v579 = vpop.f32.mrf.mxu0
        %v580 = vadd.f32 %v506, %v579
        %581 = vmatmul.f32.gmra.mxu0 %v468
        %v582 = vpop.f32.mrf.mxu0
        %v583 = vadd.f32 %v506, %v582
        %584 = vmatmul.f32.gmra.mxu0 %v469
        %v585 = vpop.f32.mrf.mxu0
        %v586 = vadd.f32 %v506, %v585
        %587 = vmatmul.f32.gmra.mxu0 %v470
        %v588 = vpop.f32.mrf.mxu0
        %v589 = vadd.f32 %v506, %v588
        %590 = vdwg.mxu0
        %v591 = vtanh.pop %v527
        %v592 = vtanh.pop %v568
        %v593 = vtanh.pop %v530
        %v594 = vtanh.pop %v571
        %v595 = vtanh.pop %v533
        %v596 = vtanh.pop %v574
        %v597 = vtanh.pop %v536
        %v598 = vtanh.pop %v577
        %v599 = vtanh.pop %v539
        %v600 = vtanh.pop %v580
        %v601 = vtanh.pop %v542
        %v602 = vtanh.pop %v583
        %v603 = vtanh.pop %v545
        %v604 = vtanh.pop %v586
        %v605 = vtanh.pop %v548
        %v606 = vtanh.pop %v589
        %607 = vst [vmem:[%s304] sm:$0xff] %v591
        %608 = vst [vmem:[%s304 + $0x8] sm:$0xff] %v592
        %609 = vst [vmem:[%s304 + $0x10] sm:$0xff] %v593
        %610 = vst [vmem:[%s304 + $0x18] sm:$0xff] %v594
        %611 = vst [vmem:[%s304 + $0x20] sm:$0xff] %v595
        %612 = vst [vmem:[%s304 + $0x28] sm:$0xff] %v596
        %613 = vst [vmem:[%s304 + $0x30] sm:$0xff] %v597
        %614 = vst [vmem:[%s304 + $0x38] sm:$0xff] %v598
        %615 = vst [vmem:[%s304 + $0x40] sm:$0xff] %v599
        %616 = vst [vmem:[%s304 + $0x48] sm:$0xff] %v600
        %617 = vst [vmem:[%s304 + $0x50] sm:$0xff] %v601
        %618 = vst [vmem:[%s304 + $0x58] sm:$0xff] %v602
        %619 = vst [vmem:[%s304 + $0x60] sm:$0xff] %v603
        %620 = vst [vmem:[%s304 + $0x68] sm:$0xff] %v604
        %621 = vst [vmem:[%s304 + $0x70] sm:$0xff] %v605
        %622 = vst [vmem:[%s304 + $0x78] sm:$0xff] %v606
        %s623 = sand.u32 %s183, 1
        %s624 = scalar_lea.sflag [#allocation4], %s623
        %s625 = sand.u32 %s183, 1
        %s626 = smul.addr %s625, 128
        %s627 = scalar_lea.vmem [#allocation7], %s626
        // Predicated region
        $region57: #{generator_forward.1} parent=47 // pred_check
          %p628 = pneg %p193
        $region58: #{generator_forward.1} parent=47 // pred_check_branch
          %630 = sbr.rel (%p628) target = $region60
        $region59: #{generator_forward.1} parent=47 // pred_region
          %s631 = smul.u32 8, %s23
          %633 = vsyncadd %s624, 0
          %s634 = smul.addr %s631, 2
          %s635 = smul.addr %s634, 8
          %s636 = scalar_lea.hbm %s7, %s635
          %s637 = sshll.u32 %s627, 4
          %s638 = int_to_ptr.vmem [resolvable:$true] %s637
          %s639 = sshll.u32 %s636, 4
          %s640 = int_to_ptr.hbm [resolvable:$true] %s639
          %645 = dma.vmem_to_hbm [thread:$0]  %s638, 2048, %s640, %s624, 256, 256, 16
        $region60: #{generator_forward.1} parent=47 // pred_fallthru
          _
      $region48: #{generator_forward.1} parent=5 // pred_fallthru
        _
      %p646 = scmp.le.s32.totalorder 2, %s18
      // Predicated region
      $region61: #{generator_forward.1} parent=5 // pred_check
        %p647 = pneg %p646
      $region62: #{generator_forward.1} parent=5 // pred_check_branch
        %649 = sbr.rel (%p647) target = $region64
      $region63: #{generator_forward.1} parent=5 // pred_region
        %s650 = ssub.s32 %s18, 2
        // Predicated region
        $region65: #{generator_forward.1} parent=63 // pred_check
          %p651 = pneg %p199
        $region66: #{generator_forward.1} parent=63 // pred_check_branch
          %653 = sbr.rel (%p651) target = $region68
        $region67: #{generator_forward.1} parent=63 // pred_region
          %s654 = sand.u32 %s184, 1
          %s655 = scalar_lea.sflag [#allocation4], %s654
          %s656 = sand.u32 %s184, 1
          %s657 = smul.addr %s656, 128
          %s658 = scalar_lea.vmem [#allocation7], %s657
          %660 = dma.done %s655, 2048
        $region68: #{generator_forward.1} parent=63 // pred_fallthru
          _
      $region64: #{generator_forward.1} parent=5 // pred_fallthru
        _
    $region6: #{generator_forward.1} parent=1 // loop_footer
      %s22 = sadd.s32 1, %s18
    $region7: #{generator_forward.1} parent=1 // loop_footer_branch
      %17 = sbr.rel target = $region3
    $region8: #{generator_forward.1} parent=1 // loop_exit
      _
    %661 = vsyncpa [#allocation3], 1
    %s662 = scalar_lea.sflag [#allocation3], 1
    %663 = vsyncpa %s662, 1
    %664 = vsyncpa [#allocation6], 1
    %665 = vsyncpa [#allocation4], 1
    %s666 = scalar_lea.sflag [#allocation4], 1
    %667 = vsyncpa %s666, 1

</llo_original>
